<compile_context>
chip_gen: v7x
topology: tpu7x:2x2x1
jax: 0.10.0
libtpu: 0.0.40
codegen_flags: <defaults>
</compile_context>

<pallas_src>
import jax
import jax.numpy as jnp
from jax.experimental import pallas as pl
from jax.experimental.pallas import tpu as pltpu

IN_DIM = 784          # flattened MNIST image
ENCODING_DIM = 32     # bottleneck width (matches the PyTorch module)

SUBLANE = 8
ENC_PAD = 128         # hidden dim padded to one lane-dense vreg width (zeros)
TB_CAP = 1024         # max batch-tile rows


def _round_up(x, m):
    return ((x + m - 1) // m) * m


def autoencoder_kernel(x_ref, w1_ref, b1_ref, w2_ref, b2_ref, out_ref):
    # x streamed as f32 from HBM; cast to bf16 in VMEM (cheap VPU op hidden
    # under the DMA) right before the MXU.
    x = x_ref[...].astype(jnp.bfloat16)

    # encoder: Linear(784->32) + ReLU. Hidden padded to 128 lanes (extra
    # columns are exact zeros). bf16 MXU matmul, f32 accumulate + epilogue.
    h = jnp.dot(x, w1_ref[...], preferred_element_type=jnp.float32)
    h = jnp.maximum(h + b1_ref[...], 0.0)                    # (TB, 128)

    # decoder: Linear(32->784) + Sigmoid (sigmoid runs on the EUP).
    y = jnp.dot(h.astype(jnp.bfloat16), w2_ref[...],
                preferred_element_type=jnp.float32)
    y = y + b2_ref[...]                                      # (TB, 784)
    out_ref[...] = jax.nn.sigmoid(y).astype(out_ref.dtype)   # bf16 write stream


@jax.jit
def autoencoder_forward(x, w1, b1, w2, b2):
    B = x.shape[0]

    # --- batch tiling (no padded copy of x; last block may be ragged) -------
    Bs = _round_up(B, SUBLANE)
    n_steps = max(1, pl.cdiv(Bs, TB_CAP))
    if Bs >= 2 * SUBLANE:
        n_steps = max(n_steps, 2)          # >=2 grid steps -> v7x megacore split
    TB = min(_round_up(pl.cdiv(Bs, n_steps), SUBLANE), Bs)
    if B < SUBLANE:
        TB = B                             # tiny batch: block == full array
    grid = pl.cdiv(B, TB)

    # --- tiny padded, bf16, VMEM-resident weights ----------------------------
    # (padded rows/cols are exact zeros -> valid outputs are unchanged)
    w1p = jnp.zeros((IN_DIM, ENC_PAD), jnp.bfloat16).at[:, :ENCODING_DIM].set(
        w1.astype(jnp.bfloat16))
    b1p = jnp.zeros((1, ENC_PAD), jnp.float32).at[:, :ENCODING_DIM].set(
        b1.reshape(1, ENCODING_DIM).astype(jnp.float32))
    w2p = jnp.zeros((ENC_PAD, IN_DIM), jnp.bfloat16).at[:ENCODING_DIM, :].set(
        w2.astype(jnp.bfloat16))
    b2p = b2.reshape(1, IN_DIM).astype(jnp.float32)

    rows = grid * TB
    cost = pl.CostEstimate(
        flops=4 * rows * IN_DIM * ENC_PAD,          # two matmuls
        transcendentals=rows * IN_DIM,              # sigmoid
        bytes_accessed=(B * IN_DIM * x.dtype.itemsize   # x read once
                        + B * IN_DIM * 2                # bf16 output write
                        + w1p.size * 2 + w2p.size * 2
                        + b1p.size * 4 + b2p.size * 4),
    )

    out = pl.pallas_call(
        autoencoder_kernel,
        out_shape=jax.ShapeDtypeStruct((B, IN_DIM), jnp.bfloat16),
        grid=(grid,),
        in_specs=[
            pl.BlockSpec((TB, IN_DIM), lambda i: (i, 0)),       # x: batch-tiled
            pl.BlockSpec((IN_DIM, ENC_PAD), lambda i: (0, 0)),  # w1: resident
            pl.BlockSpec((1, ENC_PAD), lambda i: (0, 0)),       # b1
            pl.BlockSpec((ENC_PAD, IN_DIM), lambda i: (0, 0)),  # w2
            pl.BlockSpec((1, IN_DIM), lambda i: (0, 0)),        # b2
        ],
        out_specs=pl.BlockSpec((TB, IN_DIM), lambda i: (i, 0)),
        compiler_params=pltpu.CompilerParams(
            dimension_semantics=("parallel",),        # megacore split on v7x
            vmem_limit_bytes=32 * 1024 * 1024,        # explicit budget (portable)
        ),
        cost_estimate=cost,
    )(x, w1p, b1p, w2p, b2p)

    # bf16 on purpose (halves the HBM write stream); cast in the caller if f32
    # is required.
    return out


def init_params(key):
    """Deterministic init mimicking PyTorch's default Linear init
    (uniform(-1/sqrt(fan_in), 1/sqrt(fan_in)))."""
    k1, k2, k3, k4 = jax.random.split(key, 4)
    bound1 = 1.0 / jnp.sqrt(IN_DIM)
    bound2 = 1.0 / jnp.sqrt(ENCODING_DIM)
    # stored as [in, out] so the kernel does x @ W (PyTorch stores [out, in])
    w1 = jax.random.uniform(k1, (IN_DIM, ENCODING_DIM), jnp.float32, -bound1, bound1)
    b1 = jax.random.uniform(k2, (ENCODING_DIM,), jnp.float32, -bound1, bound1)
    w2 = jax.random.uniform(k3, (ENCODING_DIM, IN_DIM), jnp.float32, -bound2, bound2)
    b2 = jax.random.uniform(k4, (IN_DIM,), jnp.float32, -bound2, bound2)
    return w1, b1, w2, b2


def reference_forward(x, w1, b1, w2, b2):
    h = jnp.maximum(x @ w1 + b1, 0.0)
    return jax.nn.sigmoid(h @ w2 + b2)


if __name__ == "__main__":
    key = jax.random.PRNGKey(0)
    k_x, k_p = jax.random.split(key)

    B = 8  # small batch; input is a flattened MNIST image (784,)
    x = jax.random.uniform(k_x, (B, IN_DIM), jnp.float32)

    w1, b1, w2, b2 = init_params(k_p)

    out = autoencoder_forward(x, w1, b1, w2, b2)
    out = jax.block_until_ready(out)

    ref = reference_forward(x, w1, b1, w2, b2)
    assert out.shape == (B, IN_DIM)
    assert out.dtype == jnp.bfloat16
    # bf16 inputs/weights on the MXU (f32 accumulate) + bf16 output rounding,
    # sigmoid output in [0, 1] -> well within 2e-2 absolute tolerance.
    assert jnp.allclose(out.astype(jnp.float32), ref, atol=2e-2, rtol=0.0), \
        "mismatch vs reference"

    print("KERNEL_OK")
</pallas_src>

<mosaic_0001>
module attributes {stable_mosaic.version = 11 : i64} {
  func.func @autoencoder_kernel(%arg0: i32, %arg1: memref<8x784xf32, #tpu.memory_space<vmem>>, %arg2: memref<784x128xbf16, #tpu.memory_space<vmem>>, %arg3: memref<1x128xf32, #tpu.memory_space<vmem>>, %arg4: memref<128x784xbf16, #tpu.memory_space<vmem>>, %arg5: memref<1x784xf32, #tpu.memory_space<vmem>>, %arg6: memref<8x784xbf16, #tpu.memory_space<vmem>>) attributes {dimension_semantics = [#tpu.dimension_semantics<parallel>], iteration_bounds = array<i64: 1>, scalar_prefetch = 0 : i64, scratch_operands = 0 : i64, tpu.core_type = #tpu.core_type<tc>, window_params = [{transform_indices = @transform_0, window_bounds = array<i64: 8, 784>}, {pipeline_mode = #tpu.pipeline_mode<synchronous>, transform_indices = @transform_1, window_bounds = array<i64: 784, 128>}, {pipeline_mode = #tpu.pipeline_mode<synchronous>, transform_indices = @transform_2, window_bounds = array<i64: 1, 128>}, {pipeline_mode = #tpu.pipeline_mode<synchronous>, transform_indices = @transform_3, window_bounds = array<i64: 128, 784>}, {pipeline_mode = #tpu.pipeline_mode<synchronous>, transform_indices = @transform_4, window_bounds = array<i64: 1, 784>}, {transform_indices = @transform_5, window_bounds = array<i64: 8, 784>}]} {
    %c0 = arith.constant 0 : index
    %c0_0 = arith.constant 0 : index
    %0 = vector.load %arg1[%c0, %c0_0] : memref<8x784xf32, #tpu.memory_space<vmem>>, vector<8x784xf32>
    %1 = arith.truncf %0 : vector<8x784xf32> to vector<8x784xbf16>
    %c0_1 = arith.constant 0 : index
    %c0_2 = arith.constant 0 : index
    %2 = vector.load %arg2[%c0_1, %c0_2] : memref<784x128xbf16, #tpu.memory_space<vmem>>, vector<784x128xbf16>
    %cst = arith.constant dense<0.000000e+00> : vector<8x128xf32>
    %3 = tpu.matmul %1, %2, %cst {dimension_numbers = #tpu.dot_dimension_numbers<[1], [0], [0], [1], [0, 0, 1, 1], [], []>} : vector<8x784xbf16>, vector<784x128xbf16>, vector<8x128xf32> -> vector<8x128xf32>
    %c0_3 = arith.constant 0 : index
    %c0_4 = arith.constant 0 : index
    %4 = vector.load %arg3[%c0_3, %c0_4] : memref<1x128xf32, #tpu.memory_space<vmem>>, vector<1x128xf32>
    %5 = vector.broadcast %4 : vector<1x128xf32> to vector<8x128xf32>
    %6 = arith.addf %3, %5 : vector<8x128xf32>
    %cst_5 = arith.constant 0.000000e+00 : f32
    %7 = vector.broadcast %cst_5 : f32 to vector<8x128xf32>
    %8 = arith.maximumf %6, %7 : vector<8x128xf32>
    %9 = arith.truncf %8 : vector<8x128xf32> to vector<8x128xbf16>
    %c0_6 = arith.constant 0 : index
    %c0_7 = arith.constant 0 : index
    %10 = vector.load %arg4[%c0_6, %c0_7] : memref<128x784xbf16, #tpu.memory_space<vmem>>, vector<128x784xbf16>
    %cst_8 = arith.constant dense<0.000000e+00> : vector<8x784xf32>
    %11 = tpu.matmul %9, %10, %cst_8 {dimension_numbers = #tpu.dot_dimension_numbers<[1], [0], [0], [1], [0, 0, 1, 1], [], []>} : vector<8x128xbf16>, vector<128x784xbf16>, vector<8x784xf32> -> vector<8x784xf32>
    %c0_9 = arith.constant 0 : index
    %c0_10 = arith.constant 0 : index
    %12 = vector.load %arg5[%c0_9, %c0_10] : memref<1x784xf32, #tpu.memory_space<vmem>>, vector<1x784xf32>
    %13 = vector.broadcast %12 : vector<1x784xf32> to vector<8x784xf32>
    %14 = arith.addf %11, %13 : vector<8x784xf32>
    %15 = arith.negf %14 : vector<8x784xf32>
    %16 = math.exp %15 : vector<8x784xf32>
    %cst_11 = arith.constant 1.000000e+00 : f32
    %17 = vector.broadcast %cst_11 : f32 to vector<8x784xf32>
    %18 = arith.addf %17, %16 : vector<8x784xf32>
    %19 = arith.divf %17, %18 : vector<8x784xf32>
    %20 = arith.truncf %19 : vector<8x784xf32> to vector<8x784xbf16>
    %c0_12 = arith.constant 0 : index
    %c0_13 = arith.constant 0 : index
    %21 = vector.load %arg6[%c0_12, %c0_13] : memref<8x784xbf16, #tpu.memory_space<vmem>>, vector<8x784xbf16>
    tpu.vector_store %arg6[%c0_12, %c0_13], %20 {strides = array<i32>} : memref<8x784xbf16, #tpu.memory_space<vmem>>, vector<8x784xbf16>,
    return
  }
  func.func @transform_0(%arg0: i32) -> (i32, i32) {
    %c0_i32 = arith.constant 0 : i32
    %c0_i32_0 = arith.constant 0 : i32
    return %arg0, %c0_i32 : i32, i32
  }
  func.func @transform_1(%arg0: i32) -> (i32, i32) {
    %c0_i32 = arith.constant 0 : i32
    %c0_i32_0 = arith.constant 0 : i32
    %c0_i32_1 = arith.constant 0 : i32
    return %c0_i32, %c0_i32_0 : i32, i32
  }
  func.func @transform_2(%arg0: i32) -> (i32, i32) {
    %c0_i32 = arith.constant 0 : i32
    %c0_i32_0 = arith.constant 0 : i32
    %c0_i32_1 = arith.constant 0 : i32
    return %c0_i32, %c0_i32_0 : i32, i32
  }
  func.func @transform_3(%arg0: i32) -> (i32, i32) {
    %c0_i32 = arith.constant 0 : i32
    %c0_i32_0 = arith.constant 0 : i32
    %c0_i32_1 = arith.constant 0 : i32
    return %c0_i32, %c0_i32_0 : i32, i32
  }
  func.func @transform_4(%arg0: i32) -> (i32, i32) {
    %c0_i32 = arith.constant 0 : i32
    %c0_i32_0 = arith.constant 0 : i32
    %c0_i32_1 = arith.constant 0 : i32
    return %c0_i32, %c0_i32_0 : i32, i32
  }
  func.func @transform_5(%arg0: i32) -> (i32, i32) {
    %c0_i32 = arith.constant 0 : i32
    %c0_i32_0 = arith.constant 0 : i32
    return %arg0, %c0_i32 : i32, i32
  }
}

</mosaic_0001>

<llo_original>
// kernel: autoencoder_forward.1
$region0: #{autoencoder_forward.1}
  #allocation0 [shape = 'u32[]', space=smem, size = 0x4, offset = 0x4, fixed_abs, tag = 'smem constant byte address 0x4 - core index']
  #allocation1 [shape = 'u32[144,128]{1,0:T(1,128)}', space=vmem, size = 0x12000, scoped, tag = 'internal scratch']
  %s0 = inlined_call_operand.vmem [shape: f32[8,784], index: 0, kind: input, shape index: {}]
  %s1 = inlined_call_operand.vmem [shape: bf16[784,128], index: 1, kind: input, shape index: {}]
  %s2 = inlined_call_operand.vmem [shape: f32[1,128], index: 2, kind: input, shape index: {}]
  %s3 = inlined_call_operand.vmem [shape: bf16[128,784], index: 3, kind: input, shape index: {}]
  %s4 = inlined_call_operand.vmem [shape: f32[1,784], index: 4, kind: input, shape index: {}]
  %s5 = inlined_call_operand.hbm [shape: bf16[8,784], index: 5, kind: output, shape index: {}]
  %s6 = sld [smem:[#allocation0]]
  $region30: #{autoencoder_forward.1} parent=0
    _
  %s8 = ssub.s32 1, %s6
  %s9 = scalar_select 0, %s8, %s6
  $region1: #{autoencoder_forward.1} parent=0
    #allocation2 [shape = 'u8[14336]{0}', space=vmem, size = 0x3800, scoped, tag = 'output window, operand 0, single buffered']
    #allocation3 [shape = 's32[1]{0}', space=sflag, size = 0x4, scoped, tag = 'scoped memory for autoencoder_forward.1']
    %10 = vsyncpa [#allocation3], 0
    // Predicated region
    $region2: #{autoencoder_forward.1} parent=1 // pred_check
      _
    $region3: #{autoencoder_forward.1} parent=1 // pred_check_branch
      %12 = sbr.rel (0) target = $region5
    $region4: #{autoencoder_forward.1} parent=1 // pred_region
      _
    $region5: #{autoencoder_forward.1} parent=1 // pred_fallthru
      _
    // Predicated region
    $region6: #{autoencoder_forward.1} parent=1 // pred_check
      _
    $region7: #{autoencoder_forward.1} parent=1 // pred_check_branch
      %14 = sbr.rel (0) target = $region9
    $region8: #{autoencoder_forward.1} parent=1 // pred_region
      _
    $region9: #{autoencoder_forward.1} parent=1 // pred_fallthru
      _
    // Predicated region
    $region10: #{autoencoder_forward.1} parent=1 // pred_check
      _
    $region11: #{autoencoder_forward.1} parent=1 // pred_check_branch
      %16 = sbr.rel (0) target = $region13
    $region12: #{autoencoder_forward.1} parent=1 // pred_region
      _
    $region13: #{autoencoder_forward.1} parent=1 // pred_fallthru
      _
    // Predicated region
    $region14: #{autoencoder_forward.1} parent=1 // pred_check
      _
    $region15: #{autoencoder_forward.1} parent=1 // pred_check_branch
      %18 = sbr.rel (0) target = $region17
    $region16: #{autoencoder_forward.1} parent=1 // pred_region
      _
    $region17: #{autoencoder_forward.1} parent=1 // pred_fallthru
      _
    // Predicated region
    $region18: #{autoencoder_forward.1} parent=1 // pred_check
      _
    $region19: #{autoencoder_forward.1} parent=1 // pred_check_branch
      %20 = sbr.rel (0) target = $region21
    $region20: #{autoencoder_forward.1} parent=1 // pred_region
      _
    $region21: #{autoencoder_forward.1} parent=1 // pred_fallthru
      _
    %v22 = vld [vmem:[%s0] sm:$0xff]
    %v23 = vld [vmem:[%s0 + $0x8] sm:$0xff]
    %v24 = vld [vmem:[%s0 + $0x10] sm:$0xff]
    %v25 = vld [vmem:[%s0 + $0x18] sm:$0xff]
    %v26 = vld [vmem:[%s0 + $0x20] sm:$0xff]
    %v27 = vld [vmem:[%s0 + $0x28] sm:$0xff]
    %v28 = vld [vmem:[%s0 + $0x30] sm:$0xff]
    %v29 = vpack.c.bf16 %v22, %v22
    %v30 = vpack.c.bf16 %v23, %v23
    %v31 = vpack.c.bf16 %v24, %v24
    %v32 = vpack.c.bf16 %v25, %v25
    %v33 = vpack.c.bf16 %v26, %v26
    %v34 = vpack.c.bf16 %v27, %v27
    %v35 = vpack.c.bf16 %v28, %v28
    %v36 = vld [vmem:[%s1] sm:$0xf]
    %v37 = vld [vmem:[%s1 + $0x4] sm:$0xf]
    %v38 = vld [vmem:[%s1 + $0x8] sm:$0xf]
    %v39 = vld [vmem:[%s1 + $0xc] sm:$0xf]
    %v40 = vld [vmem:[%s1 + $0x10] sm:$0xf]
    %v41 = vld [vmem:[%s1 + $0x14] sm:$0xf]
    %v42 = vld [vmem:[%s1 + $0x18] sm:$0xf]
    %v43 = vld [vmem:[%s1 + $0x1c] sm:$0xf]
    %v44 = vld [vmem:[%s1 + $0x20] sm:$0xf]
    %v45 = vld [vmem:[%s1 + $0x24] sm:$0xf]
    %v46 = vld [vmem:[%s1 + $0x28] sm:$0xf]
    %v47 = vld [vmem:[%s1 + $0x2c] sm:$0xf]
    %v48 = vld [vmem:[%s1 + $0x30] sm:$0xf]
    %v49 = vld [vmem:[%s1 + $0x34] sm:$0xf]
    %v50 = vld [vmem:[%s1 + $0x38] sm:$0xf]
    %v51 = vld [vmem:[%s1 + $0x3c] sm:$0xf]
    %v52 = vld [vmem:[%s1 + $0x40] sm:$0xf]
    %v53 = vld [vmem:[%s1 + $0x44] sm:$0xf]
    %v54 = vld [vmem:[%s1 + $0x48] sm:$0xf]
    %v55 = vld [vmem:[%s1 + $0x4c] sm:$0xf]
    %v56 = vld [vmem:[%s1 + $0x50] sm:$0xf]
    %v57 = vld [vmem:[%s1 + $0x54] sm:$0xf]
    %v58 = vld [vmem:[%s1 + $0x58] sm:$0xf]
    %v59 = vld [vmem:[%s1 + $0x5c] sm:$0xf]
    %v60 = vld [vmem:[%s1 + $0x60] sm:$0xf]
    %v61 = vld [vmem:[%s1 + $0x64] sm:$0xf]
    %v62 = vld [vmem:[%s1 + $0x68] sm:$0xf]
    %v63 = vld [vmem:[%s1 + $0x6c] sm:$0xf]
    %v64 = vld [vmem:[%s1 + $0x70] sm:$0xf]
    %v65 = vld [vmem:[%s1 + $0x74] sm:$0xf]
    %v66 = vld [vmem:[%s1 + $0x78] sm:$0xf]
    %v67 = vld [vmem:[%s1 + $0x7c] sm:$0xf]
    %v68 = vld [vmem:[%s1 + $0x80] sm:$0xf]
    %v69 = vld [vmem:[%s1 + $0x84] sm:$0xf]
    %v70 = vld [vmem:[%s1 + $0x88] sm:$0xf]
    %v71 = vld [vmem:[%s1 + $0x8c] sm:$0xf]
    %v72 = vld [vmem:[%s1 + $0x90] sm:$0xf]
    %v73 = vld [vmem:[%s1 + $0x94] sm:$0xf]
    %v74 = vld [vmem:[%s1 + $0x98] sm:$0xf]
    %v75 = vld [vmem:[%s1 + $0x9c] sm:$0xf]
    %v76 = vld [vmem:[%s1 + $0xa0] sm:$0xf]
    %v77 = vld [vmem:[%s1 + $0xa4] sm:$0xf]
    %v78 = vld [vmem:[%s1 + $0xa8] sm:$0xf]
    %v79 = vld [vmem:[%s1 + $0xac] sm:$0xf]
    %v80 = vld [vmem:[%s1 + $0xb0] sm:$0xf]
    %v81 = vld [vmem:[%s1 + $0xb4] sm:$0xf]
    %v82 = vld [vmem:[%s1 + $0xb8] sm:$0xf]
    %v83 = vld [vmem:[%s1 + $0xbc] sm:$0xf]
    %v84 = vld [vmem:[%s1 + $0xc0] sm:$0xf]
    %v85 = vld [vmem:[%s1 + $0xc4] sm:$0xf]
    %v86 = vld [vmem:[%s1 + $0xc8] sm:$0xf]
    %v87 = vld [vmem:[%s1 + $0xcc] sm:$0xf]
    %v88 = vld [vmem:[%s1 + $0xd0] sm:$0xf]
    %v89 = vld [vmem:[%s1 + $0xd4] sm:$0xf]
    %v90 = vld [vmem:[%s1 + $0xd8] sm:$0xf]
    %v91 = vld [vmem:[%s1 + $0xdc] sm:$0xf]
    %v92 = vld [vmem:[%s1 + $0xe0] sm:$0xf]
    %v93 = vld [vmem:[%s1 + $0xe4] sm:$0xf]
    %v94 = vld [vmem:[%s1 + $0xe8] sm:$0xf]
    %v95 = vld [vmem:[%s1 + $0xec] sm:$0xf]
    %v96 = vld [vmem:[%s1 + $0xf0] sm:$0xf]
    %v97 = vld [vmem:[%s1 + $0xf4] sm:$0xf]
    %v98 = vld [vmem:[%s1 + $0xf8] sm:$0xf]
    %v99 = vld [vmem:[%s1 + $0xfc] sm:$0xf]
    %v100 = vld [vmem:[%s1 + $0x100] sm:$0xf]
    %v101 = vld [vmem:[%s1 + $0x104] sm:$0xf]
    %v102 = vld [vmem:[%s1 + $0x108] sm:$0xf]
    %v103 = vld [vmem:[%s1 + $0x10c] sm:$0xf]
    %v104 = vld [vmem:[%s1 + $0x110] sm:$0xf]
    %v105 = vld [vmem:[%s1 + $0x114] sm:$0xf]
    %v106 = vld [vmem:[%s1 + $0x118] sm:$0xf]
    %v107 = vld [vmem:[%s1 + $0x11c] sm:$0xf]
    %v108 = vld [vmem:[%s1 + $0x120] sm:$0xf]
    %v109 = vld [vmem:[%s1 + $0x124] sm:$0xf]
    %v110 = vld [vmem:[%s1 + $0x128] sm:$0xf]
    %v111 = vld [vmem:[%s1 + $0x12c] sm:$0xf]
    %v112 = vld [vmem:[%s1 + $0x130] sm:$0xf]
    %v113 = vld [vmem:[%s1 + $0x134] sm:$0xf]
    %v114 = vld [vmem:[%s1 + $0x138] sm:$0xf]
    %v115 = vld [vmem:[%s1 + $0x13c] sm:$0xf]
    %v116 = vld [vmem:[%s1 + $0x140] sm:$0xf]
    %v117 = vld [vmem:[%s1 + $0x144] sm:$0xf]
    %v118 = vld [vmem:[%s1 + $0x148] sm:$0xf]
    %v119 = vld [vmem:[%s1 + $0x14c] sm:$0xf]
    %v120 = vld [vmem:[%s1 + $0x150] sm:$0xf]
    %v121 = vld [vmem:[%s1 + $0x154] sm:$0xf]
    %v122 = vld [vmem:[%s1 + $0x158] sm:$0xf]
    %v123 = vld [vmem:[%s1 + $0x15c] sm:$0xf]
    %v124 = vld [vmem:[%s1 + $0x160] sm:$0xf]
    %v125 = vld [vmem:[%s1 + $0x164] sm:$0xf]
    %v126 = vld [vmem:[%s1 + $0x168] sm:$0xf]
    %v127 = vld [vmem:[%s1 + $0x16c] sm:$0xf]
    %v128 = vld [vmem:[%s1 + $0x170] sm:$0xf]
    %v129 = vld [vmem:[%s1 + $0x174] sm:$0xf]
    %v130 = vld [vmem:[%s1 + $0x178] sm:$0xf]
    %v131 = vld [vmem:[%s1 + $0x17c] sm:$0xf]
    %v132 = vld [vmem:[%s1 + $0x180] sm:$0xf]
    %v133 = vld [vmem:[%s1 + $0x184] sm:$0xf]
    %v134 = vld [vmem:[%s2] sm:$0x1]
    %v136 = vlaneseq
    %v137 = vshrl.u32 %v136, 7
    %v138 = vsub.s32 0, %v137
    %v139 = vrot.slane %v134, %v138
    %v239 = vunpack.c.l.b16 %v36
    %v240 = vunpack.c.l.b16 %v37
    %v241 = vunpack.c.l.b16 %v38
    %v242 = vunpack.c.l.b16 %v39
    %v243 = vunpack.c.l.b16 %v40
    %v244 = vunpack.c.l.b16 %v41
    %v245 = vunpack.c.l.b16 %v42
    %v246 = vunpack.c.l.b16 %v43
    %v247 = vunpack.c.l.b16 %v44
    %v248 = vunpack.c.l.b16 %v45
    %v249 = vunpack.c.l.b16 %v46
    %v250 = vunpack.c.l.b16 %v47
    %v251 = vunpack.c.l.b16 %v48
    %v252 = vunpack.c.l.b16 %v49
    %v253 = vunpack.c.l.b16 %v50
    %v254 = vunpack.c.l.b16 %v51
    %v255 = vunpack.c.l.b16 %v52
    %v256 = vunpack.c.l.b16 %v53
    %v257 = vunpack.c.l.b16 %v54
    %v258 = vunpack.c.l.b16 %v55
    %v259 = vunpack.c.l.b16 %v56
    %v260 = vunpack.c.l.b16 %v57
    %v261 = vunpack.c.l.b16 %v58
    %v262 = vunpack.c.l.b16 %v59
    %v263 = vunpack.c.l.b16 %v60
    %v264 = vunpack.c.l.b16 %v61
    %v265 = vunpack.c.l.b16 %v62
    %v266 = vunpack.c.l.b16 %v63
    %v267 = vunpack.c.l.b16 %v64
    %v268 = vunpack.c.l.b16 %v65
    %v269 = vunpack.c.l.b16 %v66
    %v270 = vunpack.c.l.b16 %v67
    %v271 = vunpack.c.l.b16 %v68
    %v272 = vunpack.c.l.b16 %v69
    %v273 = vunpack.c.l.b16 %v70
    %v274 = vunpack.c.l.b16 %v71
    %v275 = vunpack.c.l.b16 %v72
    %v276 = vunpack.c.l.b16 %v73
    %v277 = vunpack.c.l.b16 %v74
    %v278 = vunpack.c.l.b16 %v75
    %v279 = vunpack.c.l.b16 %v76
    %v280 = vunpack.c.l.b16 %v77
    %v281 = vunpack.c.l.b16 %v78
    %v282 = vunpack.c.l.b16 %v79
    %v283 = vunpack.c.l.b16 %v80
    %v284 = vunpack.c.l.b16 %v81
    %v285 = vunpack.c.l.b16 %v82
    %v286 = vunpack.c.l.b16 %v83
    %v287 = vunpack.c.l.b16 %v84
    %v288 = vunpack.c.l.b16 %v85
    %v289 = vunpack.c.l.b16 %v86
    %v290 = vunpack.c.l.b16 %v87
    %v291 = vunpack.c.l.b16 %v88
    %v292 = vunpack.c.l.b16 %v89
    %v293 = vunpack.c.l.b16 %v90
    %v294 = vunpack.c.l.b16 %v91
    %v295 = vunpack.c.l.b16 %v92
    %v296 = vunpack.c.l.b16 %v93
    %v297 = vunpack.c.l.b16 %v94
    %v298 = vunpack.c.l.b16 %v95
    %v299 = vunpack.c.l.b16 %v96
    %v300 = vunpack.c.l.b16 %v97
    %v301 = vunpack.c.l.b16 %v98
    %v302 = vunpack.c.l.b16 %v99
    %v303 = vunpack.c.l.b16 %v100
    %v304 = vunpack.c.l.b16 %v101
    %v305 = vunpack.c.l.b16 %v102
    %v306 = vunpack.c.l.b16 %v103
    %v307 = vunpack.c.l.b16 %v104
    %v308 = vunpack.c.l.b16 %v105
    %v309 = vunpack.c.l.b16 %v106
    %v310 = vunpack.c.l.b16 %v107
    %v311 = vunpack.c.l.b16 %v108
    %v312 = vunpack.c.l.b16 %v109
    %v313 = vunpack.c.l.b16 %v110
    %v314 = vunpack.c.l.b16 %v111
    %v315 = vunpack.c.l.b16 %v112
    %v316 = vunpack.c.l.b16 %v113
    %v317 = vunpack.c.l.b16 %v114
    %v318 = vunpack.c.l.b16 %v115
    %v319 = vunpack.c.l.b16 %v116
    %v320 = vunpack.c.l.b16 %v117
    %v321 = vunpack.c.l.b16 %v118
    %v322 = vunpack.c.l.b16 %v119
    %v323 = vunpack.c.l.b16 %v120
    %v324 = vunpack.c.l.b16 %v121
    %v325 = vunpack.c.l.b16 %v122
    %v326 = vunpack.c.l.b16 %v123
    %v327 = vunpack.c.l.b16 %v124
    %v328 = vunpack.c.l.b16 %v125
    %v329 = vunpack.c.l.b16 %v126
    %v330 = vunpack.c.l.b16 %v127
    %v331 = vunpack.c.l.b16 %v128
    %v332 = vunpack.c.l.b16 %v129
    %v333 = vunpack.c.l.b16 %v130
    %v334 = vunpack.c.l.b16 %v131
    %v335 = vunpack.c.l.b16 %v132
    %v336 = vunpack.c.l.b16 %v133
    %v337 = vpack.c.b16 %v240, %v239
    %v338 = vpack.c.b16 %v242, %v241
    %v339 = vpack.c.b16 %v244, %v243
    %v340 = vpack.c.b16 %v246, %v245
    %v341 = vpack.c.b16 %v248, %v247
    %v342 = vpack.c.b16 %v250, %v249
    %v343 = vpack.c.b16 %v252, %v251
    %v344 = vpack.c.b16 %v254, %v253
    %v345 = vpack.c.b16 %v256, %v255
    %v346 = vpack.c.b16 %v258, %v257
    %v347 = vpack.c.b16 %v260, %v259
    %v348 = vpack.c.b16 %v262, %v261
    %v349 = vpack.c.b16 %v264, %v263
    %v350 = vpack.c.b16 %v266, %v265
    %v351 = vpack.c.b16 %v268, %v267
    %v352 = vpack.c.b16 %v270, %v269
    %v353 = vpack.c.b16 %v272, %v271
    %v354 = vpack.c.b16 %v274, %v273
    %v355 = vpack.c.b16 %v276, %v275
    %v356 = vpack.c.b16 %v278, %v277
    %v357 = vpack.c.b16 %v280, %v279
    %v358 = vpack.c.b16 %v282, %v281
    %v359 = vpack.c.b16 %v284, %v283
    %v360 = vpack.c.b16 %v286, %v285
    %v361 = vpack.c.b16 %v288, %v287
    %v362 = vpack.c.b16 %v290, %v289
    %v363 = vpack.c.b16 %v292, %v291
    %v364 = vpack.c.b16 %v294, %v293
    %v365 = vpack.c.b16 %v296, %v295
    %v366 = vpack.c.b16 %v298, %v297
    %v367 = vpack.c.b16 %v300, %v299
    %v368 = vpack.c.b16 %v302, %v301
    %v369 = vpack.c.b16 %v304, %v303
    %v370 = vpack.c.b16 %v306, %v305
    %v371 = vpack.c.b16 %v308, %v307
    %v372 = vpack.c.b16 %v310, %v309
    %v373 = vpack.c.b16 %v312, %v311
    %v374 = vpack.c.b16 %v314, %v313
    %v375 = vpack.c.b16 %v316, %v315
    %v376 = vpack.c.b16 %v318, %v317
    %v377 = vpack.c.b16 %v320, %v319
    %v378 = vpack.c.b16 %v322, %v321
    %v379 = vpack.c.b16 %v324, %v323
    %v380 = vpack.c.b16 %v326, %v325
    %v381 = vpack.c.b16 %v328, %v327
    %v382 = vpack.c.b16 %v330, %v329
    %v383 = vpack.c.b16 %v332, %v331
    %v384 = vpack.c.b16 %v334, %v333
    %v385 = vpack.c.b16 %v336, %v335
    %vm435 = vcmask 130048
    %v437 = vsel %vm435, %v35, 0
    %439 = vmatprep.subr.bf16.mxu0 0
    %440 = vmatpush1.bf16.msra.mxu0 %v337
    %441 = vmatprep.subr.bf16.mxu0 0
    %442 = vmatpush1.bf16.msra.mxu0 %v338
    %443 = vmatprep.subr.bf16.mxu0 0
    %444 = vmatpush1.bf16.msra.mxu0 %v339
    %445 = vmatprep.subr.bf16.mxu0 0
    %446 = vmatpush1.bf16.msra.mxu0 %v340
    %447 = vmatprep.subr.bf16.mxu0 0
    %448 = vmatpush1.bf16.msra.mxu0 %v341
    %449 = vmatprep.subr.bf16.mxu0 0
    %450 = vmatpush1.bf16.msra.mxu0 %v342
    %451 = vmatprep.subr.bf16.mxu0 0
    %452 = vmatpush1.bf16.msra.mxu0 %v343
    %453 = vmatprep.subr.bf16.mxu0 0
    %454 = vmatpush1.bf16.msra.mxu0 %v344
    %455 = vmatprep.subr.bf16.mxu0 0
    %456 = vmatpush1.bf16.msra.mxu0 %v345
    %457 = vmatprep.subr.bf16.mxu0 0
    %458 = vmatpush1.bf16.msra.mxu0 %v346
    %459 = vmatprep.subr.bf16.mxu0 0
    %460 = vmatpush1.bf16.msra.mxu0 %v347
    %461 = vmatprep.subr.bf16.mxu0 0
    %462 = vmatpush1.bf16.msra.mxu0 %v348
    %463 = vmatprep.subr.bf16.mxu0 0
    %464 = vmatpush1.bf16.msra.mxu0 %v349
    %465 = vmatprep.subr.bf16.mxu0 0
    %466 = vmatpush1.bf16.msra.mxu0 %v350
    %467 = vmatprep.subr.bf16.mxu0 0
    %468 = vmatpush1.bf16.msra.mxu0 %v351
    %469 = vmatprep.subr.bf16.mxu0 0
    %470 = vmatpush1.bf16.msra.mxu0 %v352
    %471 = vmatprep.mubr.bf16.mxu0 %v30
    %472 = vmatmul.mubr.bf16.gmra.mrb[0].mxu0 %v29
    %v473 = vpop.f32.mrb[0].mxu0
    %v474 = vadd.f32 %v139, %v473
    %v475 = vpop.f32.mrb[0].mxu0
    %v476 = vpop.f32.mrb[0].mxu0
    %v477 = vpop.f32.mrb[0].mxu0
    %478 = vdwg.mxu0
    %479 = vmatprep.subr.bf16.mxu0 0
    %480 = vmatpush1.bf16.msra.mxu0 %v353
    %481 = vmatprep.subr.bf16.mxu0 0
    %482 = vmatpush1.bf16.msra.mxu0 %v354
    %483 = vmatprep.subr.bf16.mxu0 0
    %484 = vmatpush1.bf16.msra.mxu0 %v355
    %485 = vmatprep.subr.bf16.mxu0 0
    %486 = vmatpush1.bf16.msra.mxu0 %v356
    %487 = vmatprep.subr.bf16.mxu0 0
    %488 = vmatpush1.bf16.msra.mxu0 %v357
    %489 = vmatprep.subr.bf16.mxu0 0
    %490 = vmatpush1.bf16.msra.mxu0 %v358
    %491 = vmatprep.subr.bf16.mxu0 0
    %492 = vmatpush1.bf16.msra.mxu0 %v359
    %493 = vmatprep.subr.bf16.mxu0 0
    %494 = vmatpush1.bf16.msra.mxu0 %v360
    %495 = vmatprep.subr.bf16.mxu0 0
    %496 = vmatpush1.bf16.msra.mxu0 %v361
    %497 = vmatprep.subr.bf16.mxu0 0
    %498 = vmatpush1.bf16.msra.mxu0 %v362
    %499 = vmatprep.subr.bf16.mxu0 0
    %500 = vmatpush1.bf16.msra.mxu0 %v363
    %501 = vmatprep.subr.bf16.mxu0 0
    %502 = vmatpush1.bf16.msra.mxu0 %v364
    %503 = vmatprep.subr.bf16.mxu0 0
    %504 = vmatpush1.bf16.msra.mxu0 %v365
    %505 = vmatprep.subr.bf16.mxu0 0
    %506 = vmatpush1.bf16.msra.mxu0 %v366
    %507 = vmatprep.subr.bf16.mxu0 0
    %508 = vmatpush1.bf16.msra.mxu0 %v367
    %509 = vmatprep.subr.bf16.mxu0 0
    %510 = vmatpush1.bf16.msra.mxu0 %v368
    %511 = vmatprep.mubr.bf16.mxu0 %v32
    %512 = vmatmul.mubr.bf16.gmra.mrb[0].mxu0 %v31
    %v513 = vpop.f32.mrb[0].mxu0
    %v514 = vadd.f32 %v474, %v513
    %v515 = vpop.f32.mrb[0].mxu0
    %v516 = vpop.f32.mrb[0].mxu0
    %v517 = vpop.f32.mrb[0].mxu0
    %518 = vdwg.mxu0
    %519 = vmatprep.subr.bf16.mxu0 0
    %520 = vmatpush1.bf16.msra.mxu0 %v369
    %521 = vmatprep.subr.bf16.mxu0 0
    %522 = vmatpush1.bf16.msra.mxu0 %v370
    %523 = vmatprep.subr.bf16.mxu0 0
    %524 = vmatpush1.bf16.msra.mxu0 %v371
    %525 = vmatprep.subr.bf16.mxu0 0
    %526 = vmatpush1.bf16.msra.mxu0 %v372
    %527 = vmatprep.subr.bf16.mxu0 0
    %528 = vmatpush1.bf16.msra.mxu0 %v373
    %529 = vmatprep.subr.bf16.mxu0 0
    %530 = vmatpush1.bf16.msra.mxu0 %v374
    %531 = vmatprep.subr.bf16.mxu0 0
    %532 = vmatpush1.bf16.msra.mxu0 %v375
    %533 = vmatprep.subr.bf16.mxu0 0
    %534 = vmatpush1.bf16.msra.mxu0 %v376
    %535 = vmatprep.subr.bf16.mxu0 0
    %536 = vmatpush1.bf16.msra.mxu0 %v377
    %537 = vmatprep.subr.bf16.mxu0 0
    %538 = vmatpush1.bf16.msra.mxu0 %v378
    %539 = vmatprep.subr.bf16.mxu0 0
    %540 = vmatpush1.bf16.msra.mxu0 %v379
    %541 = vmatprep.subr.bf16.mxu0 0
    %542 = vmatpush1.bf16.msra.mxu0 %v380
    %543 = vmatprep.subr.bf16.mxu0 0
    %544 = vmatpush1.bf16.msra.mxu0 %v381
    %545 = vmatprep.subr.bf16.mxu0 0
    %546 = vmatpush1.bf16.msra.mxu0 %v382
    %547 = vmatprep.subr.bf16.mxu0 0
    %548 = vmatpush1.bf16.msra.mxu0 %v383
    %549 = vmatprep.subr.bf16.mxu0 0
    %550 = vmatpush1.bf16.msra.mxu0 %v384
    %551 = vmatprep.mubr.bf16.mxu0 %v34
    %552 = vmatmul.mubr.bf16.gmra.mrb[0].mxu0 %v33
    %v553 = vpop.f32.mrb[0].mxu0
    %v554 = vadd.f32 %v514, %v553
    %v555 = vpop.f32.mrb[0].mxu0
    %v556 = vpop.f32.mrb[0].mxu0
    %v557 = vpop.f32.mrb[0].mxu0
    %558 = vdwg.mxu0
    %559 = vmatprep.subr.bf16.mxu0 0
    %560 = vmatpush1.bf16.msra.mxu0 %v385
    %561 = vmatprep.subr.bf16.mxu0 0
    %562 = vmatpush1.bf16.msra.mxu0 0
    %563 = vmatprep.subr.bf16.mxu0 0
    %564 = vmatpush1.bf16.msra.mxu0 0
    %565 = vmatprep.subr.bf16.mxu0 0
    %566 = vmatpush1.bf16.msra.mxu0 0
    %567 = vmatprep.subr.bf16.mxu0 0
    %568 = vmatpush1.bf16.msra.mxu0 0
    %569 = vmatprep.subr.bf16.mxu0 0
    %570 = vmatpush1.bf16.msra.mxu0 0
    %571 = vmatprep.subr.bf16.mxu0 0
    %572 = vmatpush1.bf16.msra.mxu0 0
    %573 = vmatprep.subr.bf16.mxu0 0
    %574 = vmatpush1.bf16.msra.mxu0 0
    %575 = vmatprep.subr.bf16.mxu0 0
    %576 = vmatpush1.bf16.msra.mxu0 0
    %577 = vmatprep.subr.bf16.mxu0 0
    %578 = vmatpush1.bf16.msra.mxu0 0
    %579 = vmatprep.subr.bf16.mxu0 0
    %580 = vmatpush1.bf16.msra.mxu0 0
    %581 = vmatprep.subr.bf16.mxu0 0
    %582 = vmatpush1.bf16.msra.mxu0 0
    %583 = vmatprep.subr.bf16.mxu0 0
    %584 = vmatpush1.bf16.msra.mxu0 0
    %585 = vmatprep.subr.bf16.mxu0 0
    %586 = vmatpush1.bf16.msra.mxu0 0
    %587 = vmatprep.subr.bf16.mxu0 0
    %588 = vmatpush1.bf16.msra.mxu0 0
    %589 = vmatprep.subr.bf16.mxu0 0
    %590 = vmatpush1.bf16.msra.mxu0 0
    %591 = vmatprep.mubr.bf16.mxu0 0
    %592 = vmatmul.mubr.bf16.gmra.mrb[0].mxu0 %v437
    %v593 = vpop.f32.mrb[0].mxu0
    %v594 = vadd.f32 %v554, %v593
    %v595 = vpop.f32.mrb[0].mxu0
    %v596 = vpop.f32.mrb[0].mxu0
    %v597 = vpop.f32.mrb[0].mxu0
    %598 = vdwg.mxu0
    %v599 = vmax.f32 %v594, 0.0
    %v600 = vpack.c.bf16 %v599, %v599
    %v601 = vld [vmem:[%s3] sm:$0xff]
    %v602 = vld [vmem:[%s3 + $0x8] sm:$0xff]
    %v603 = vld [vmem:[%s3 + $0x10] sm:$0xff]
    %v604 = vld [vmem:[%s3 + $0x18] sm:$0xf]
    %v605 = vld [vmem:[%s3 + $0x1c] sm:$0xff]
    %v606 = vld [vmem:[%s3 + $0x24] sm:$0xff]
    %v607 = vld [vmem:[%s3 + $0x2c] sm:$0xff]
    %v608 = vld [vmem:[%s3 + $0x34] sm:$0xf]
    %v609 = vld [vmem:[%s3 + $0x38] sm:$0xff]
    %v610 = vld [vmem:[%s3 + $0x40] sm:$0xff]
    %v611 = vld [vmem:[%s3 + $0x48] sm:$0xff]
    %v612 = vld [vmem:[%s3 + $0x50] sm:$0xf]
    %v613 = vld [vmem:[%s3 + $0x54] sm:$0xff]
    %v614 = vld [vmem:[%s3 + $0x5c] sm:$0xff]
    %v615 = vld [vmem:[%s3 + $0x64] sm:$0xff]
    %v616 = vld [vmem:[%s3 + $0x6c] sm:$0xf]
    %v617 = vld [vmem:[%s3 + $0x70] sm:$0xff]
    %v618 = vld [vmem:[%s3 + $0x78] sm:$0xff]
    %v619 = vld [vmem:[%s3 + $0x80] sm:$0xff]
    %v620 = vld [vmem:[%s3 + $0x88] sm:$0xf]
    %v621 = vld [vmem:[%s3 + $0x8c] sm:$0xff]
    %v622 = vld [vmem:[%s3 + $0x94] sm:$0xff]
    %v623 = vld [vmem:[%s3 + $0x9c] sm:$0xff]
    %v624 = vld [vmem:[%s3 + $0xa4] sm:$0xf]
    %v625 = vld [vmem:[%s3 + $0xa8] sm:$0xff]
    %v626 = vld [vmem:[%s3 + $0xb0] sm:$0xff]
    %v627 = vld [vmem:[%s3 + $0xb8] sm:$0xff]
    %v628 = vld [vmem:[%s3 + $0xc0] sm:$0xf]
    %v629 = vld [vmem:[%s3 + $0xc4] sm:$0xff]
    %v630 = vld [vmem:[%s3 + $0xcc] sm:$0xff]
    %v631 = vld [vmem:[%s3 + $0xd4] sm:$0xff]
    %v632 = vld [vmem:[%s3 + $0xdc] sm:$0xf]
    %v633 = vld [vmem:[%s3 + $0xe0] sm:$0xff]
    %v634 = vld [vmem:[%s3 + $0xe8] sm:$0xff]
    %v635 = vld [vmem:[%s3 + $0xf0] sm:$0xff]
    %v636 = vld [vmem:[%s3 + $0xf8] sm:$0xf]
    %v637 = vld [vmem:[%s3 + $0xfc] sm:$0xff]
    %v638 = vld [vmem:[%s3 + $0x104] sm:$0xff]
    %v639 = vld [vmem:[%s3 + $0x10c] sm:$0xff]
    %v640 = vld [vmem:[%s3 + $0x114] sm:$0xf]
    %v641 = vld [vmem:[%s3 + $0x118] sm:$0xff]
    %v642 = vld [vmem:[%s3 + $0x120] sm:$0xff]
    %v643 = vld [vmem:[%s3 + $0x128] sm:$0xff]
    %v644 = vld [vmem:[%s3 + $0x130] sm:$0xf]
    %v645 = vld [vmem:[%s3 + $0x134] sm:$0xff]
    %v646 = vld [vmem:[%s3 + $0x13c] sm:$0xff]
    %v647 = vld [vmem:[%s3 + $0x144] sm:$0xff]
    %v648 = vld [vmem:[%s3 + $0x14c] sm:$0xf]
    %v649 = vld [vmem:[%s3 + $0x150] sm:$0xff]
    %v650 = vld [vmem:[%s3 + $0x158] sm:$0xff]
    %v651 = vld [vmem:[%s3 + $0x160] sm:$0xff]
    %v652 = vld [vmem:[%s3 + $0x168] sm:$0xf]
    %v653 = vld [vmem:[%s3 + $0x16c] sm:$0xff]
    %v654 = vld [vmem:[%s3 + $0x174] sm:$0xff]
    %v655 = vld [vmem:[%s3 + $0x17c] sm:$0xff]
    %v656 = vld [vmem:[%s3 + $0x184] sm:$0xf]
    %v657 = vld [vmem:[%s3 + $0x188] sm:$0xff]
    %v658 = vld [vmem:[%s3 + $0x190] sm:$0xff]
    %v659 = vld [vmem:[%s3 + $0x198] sm:$0xff]
    %v660 = vld [vmem:[%s3 + $0x1a0] sm:$0xf]
    %v661 = vld [vmem:[%s3 + $0x1a4] sm:$0xff]
    %v662 = vld [vmem:[%s3 + $0x1ac] sm:$0xff]
    %v663 = vld [vmem:[%s3 + $0x1b4] sm:$0xff]
    %v664 = vld [vmem:[%s3 + $0x1bc] sm:$0xf]
    %v665 = vld [vmem:[%s4] sm:$0x7f]
    %v667 = vlaneseq
    %v668 = vshrl.u32 %v667, 7
    %v669 = vsub.s32 0, %v668
    %v670 = vrot.slane %v665, %v669
    %v671 = vlaneseq
    %v672 = vshrl.u32 %v671, 7
    %v673 = vsub.s32 1, %v672
    %v674 = vrot.slane %v665, %v673
    %v675 = vlaneseq
    %v676 = vshrl.u32 %v675, 7
    %v677 = vsub.s32 2, %v676
    %v678 = vrot.slane %v665, %v677
    %v679 = vlaneseq
    %v680 = vshrl.u32 %v679, 7
    %v681 = vsub.s32 3, %v680
    %v682 = vrot.slane %v665, %v681
    %v683 = vlaneseq
    %v684 = vshrl.u32 %v683, 7
    %v685 = vsub.s32 4, %v684
    %v686 = vrot.slane %v665, %v685
    %v687 = vlaneseq
    %v688 = vshrl.u32 %v687, 7
    %v689 = vsub.s32 5, %v688
    %v690 = vrot.slane %v665, %v689
    %v691 = vlaneseq
    %v692 = vshrl.u32 %v691, 7
    %v693 = vsub.s32 6, %v692
    %v694 = vrot.slane %v665, %v693
    %v766 = vunpack.c.l.b16 %v601
    %v767 = vunpack.c.h.b16 %v601
    %v768 = vunpack.c.l.b16 %v602
    %v769 = vunpack.c.h.b16 %v602
    %v770 = vunpack.c.l.b16 %v603
    %v771 = vunpack.c.h.b16 %v603
    %v772 = vunpack.c.l.b16 %v604
    %v773 = vunpack.c.l.b16 %v605
    %v774 = vunpack.c.h.b16 %v605
    %v775 = vunpack.c.l.b16 %v606
    %v776 = vunpack.c.h.b16 %v606
    %v777 = vunpack.c.l.b16 %v607
    %v778 = vunpack.c.h.b16 %v607
    %v779 = vunpack.c.l.b16 %v608
    %v780 = vunpack.c.l.b16 %v609
    %v781 = vunpack.c.h.b16 %v609
    %v782 = vunpack.c.l.b16 %v610
    %v783 = vunpack.c.h.b16 %v610
    %v784 = vunpack.c.l.b16 %v611
    %v785 = vunpack.c.h.b16 %v611
    %v786 = vunpack.c.l.b16 %v612
    %v787 = vunpack.c.l.b16 %v613
    %v788 = vunpack.c.h.b16 %v613
    %v789 = vunpack.c.l.b16 %v614
    %v790 = vunpack.c.h.b16 %v614
    %v791 = vunpack.c.l.b16 %v615
    %v792 = vunpack.c.h.b16 %v615
    %v793 = vunpack.c.l.b16 %v616
    %v794 = vunpack.c.l.b16 %v617
    %v795 = vunpack.c.h.b16 %v617
    %v796 = vunpack.c.l.b16 %v618
    %v797 = vunpack.c.h.b16 %v618
    %v798 = vunpack.c.l.b16 %v619
    %v799 = vunpack.c.h.b16 %v619
    %v800 = vunpack.c.l.b16 %v620
    %v801 = vunpack.c.l.b16 %v621
    %v802 = vunpack.c.h.b16 %v621
    %v803 = vunpack.c.l.b16 %v622
    %v804 = vunpack.c.h.b16 %v622
    %v805 = vunpack.c.l.b16 %v623
    %v806 = vunpack.c.h.b16 %v623
    %v807 = vunpack.c.l.b16 %v624
    %v808 = vunpack.c.l.b16 %v625
    %v809 = vunpack.c.h.b16 %v625
    %v810 = vunpack.c.l.b16 %v626
    %v811 = vunpack.c.h.b16 %v626
    %v812 = vunpack.c.l.b16 %v627
    %v813 = vunpack.c.h.b16 %v627
    %v814 = vunpack.c.l.b16 %v628
    %v815 = vunpack.c.l.b16 %v629
    %v816 = vunpack.c.h.b16 %v629
    %v817 = vunpack.c.l.b16 %v630
    %v818 = vunpack.c.h.b16 %v630
    %v819 = vunpack.c.l.b16 %v631
    %v820 = vunpack.c.h.b16 %v631
    %v821 = vunpack.c.l.b16 %v632
    %v822 = vunpack.c.l.b16 %v633
    %v823 = vunpack.c.h.b16 %v633
    %v824 = vunpack.c.l.b16 %v634
    %v825 = vunpack.c.h.b16 %v634
    %v826 = vunpack.c.l.b16 %v635
    %v827 = vunpack.c.h.b16 %v635
    %v828 = vunpack.c.l.b16 %v636
    %v829 = vunpack.c.l.b16 %v637
    %v830 = vunpack.c.h.b16 %v637
    %v831 = vunpack.c.l.b16 %v638
    %v832 = vunpack.c.h.b16 %v638
    %v833 = vunpack.c.l.b16 %v639
    %v834 = vunpack.c.h.b16 %v639
    %v835 = vunpack.c.l.b16 %v640
    %v836 = vunpack.c.l.b16 %v641
    %v837 = vunpack.c.h.b16 %v641
    %v838 = vunpack.c.l.b16 %v642
    %v839 = vunpack.c.h.b16 %v642
    %v840 = vunpack.c.l.b16 %v643
    %v841 = vunpack.c.h.b16 %v643
    %v842 = vunpack.c.l.b16 %v644
    %v843 = vunpack.c.l.b16 %v645
    %v844 = vunpack.c.h.b16 %v645
    %v845 = vunpack.c.l.b16 %v646
    %v846 = vunpack.c.h.b16 %v646
    %v847 = vunpack.c.l.b16 %v647
    %v848 = vunpack.c.h.b16 %v647
    %v849 = vunpack.c.l.b16 %v648
    %v850 = vunpack.c.l.b16 %v649
    %v851 = vunpack.c.h.b16 %v649
    %v852 = vunpack.c.l.b16 %v650
    %v853 = vunpack.c.h.b16 %v650
    %v854 = vunpack.c.l.b16 %v651
    %v855 = vunpack.c.h.b16 %v651
    %v856 = vunpack.c.l.b16 %v652
    %v857 = vunpack.c.l.b16 %v653
    %v858 = vunpack.c.h.b16 %v653
    %v859 = vunpack.c.l.b16 %v654
    %v860 = vunpack.c.h.b16 %v654
    %v861 = vunpack.c.l.b16 %v655
    %v862 = vunpack.c.h.b16 %v655
    %v863 = vunpack.c.l.b16 %v656
    %v864 = vunpack.c.l.b16 %v657
    %v865 = vunpack.c.h.b16 %v657
    %v866 = vunpack.c.l.b16 %v658
    %v867 = vunpack.c.h.b16 %v658
    %v868 = vunpack.c.l.b16 %v659
    %v869 = vunpack.c.h.b16 %v659
    %v870 = vunpack.c.l.b16 %v660
    %v871 = vunpack.c.l.b16 %v661
    %v872 = vunpack.c.h.b16 %v661
    %v873 = vunpack.c.l.b16 %v662
    %v874 = vunpack.c.h.b16 %v662
    %v875 = vunpack.c.l.b16 %v663
    %v876 = vunpack.c.h.b16 %v663
    %v877 = vunpack.c.l.b16 %v664
    %v878 = vpack.c.b16 %v773, %v766
    %v879 = vpack.c.b16 %v774, %v767
    %v880 = vpack.c.b16 %v775, %v768
    %v881 = vpack.c.b16 %v776, %v769
    %v882 = vpack.c.b16 %v777, %v770
    %v883 = vpack.c.b16 %v778, %v771
    %v884 = vpack.c.b16 %v779, %v772
    %v885 = vpack.c.b16 %v787, %v780
    %v886 = vpack.c.b16 %v788, %v781
    %v887 = vpack.c.b16 %v789, %v782
    %v888 = vpack.c.b16 %v790, %v783
    %v889 = vpack.c.b16 %v791, %v784
    %v890 = vpack.c.b16 %v792, %v785
    %v891 = vpack.c.b16 %v793, %v786
    %v892 = vpack.c.b16 %v801, %v794
    %v893 = vpack.c.b16 %v802, %v795
    %v894 = vpack.c.b16 %v803, %v796
    %v895 = vpack.c.b16 %v804, %v797
    %v896 = vpack.c.b16 %v805, %v798
    %v897 = vpack.c.b16 %v806, %v799
    %v898 = vpack.c.b16 %v807, %v800
    %v899 = vpack.c.b16 %v815, %v808
    %v900 = vpack.c.b16 %v816, %v809
    %v901 = vpack.c.b16 %v817, %v810
    %v902 = vpack.c.b16 %v818, %v811
    %v903 = vpack.c.b16 %v819, %v812
    %v904 = vpack.c.b16 %v820, %v813
    %v905 = vpack.c.b16 %v821, %v814
    %v906 = vpack.c.b16 %v829, %v822
    %v907 = vpack.c.b16 %v830, %v823
    %v908 = vpack.c.b16 %v831, %v824
    %v909 = vpack.c.b16 %v832, %v825
    %v910 = vpack.c.b16 %v833, %v826
    %v911 = vpack.c.b16 %v834, %v827
    %v912 = vpack.c.b16 %v835, %v828
    %v913 = vpack.c.b16 %v843, %v836
    %v914 = vpack.c.b16 %v844, %v837
    %v915 = vpack.c.b16 %v845, %v838
    %v916 = vpack.c.b16 %v846, %v839
    %v917 = vpack.c.b16 %v847, %v840
    %v918 = vpack.c.b16 %v848, %v841
    %v919 = vpack.c.b16 %v849, %v842
    %v920 = vpack.c.b16 %v857, %v850
    %v921 = vpack.c.b16 %v858, %v851
    %v922 = vpack.c.b16 %v859, %v852
    %v923 = vpack.c.b16 %v860, %v853
    %v924 = vpack.c.b16 %v861, %v854
    %v925 = vpack.c.b16 %v862, %v855
    %v926 = vpack.c.b16 %v863, %v856
    %v927 = vpack.c.b16 %v871, %v864
    %v928 = vpack.c.b16 %v872, %v865
    %v929 = vpack.c.b16 %v873, %v866
    %v930 = vpack.c.b16 %v874, %v867
    %v931 = vpack.c.b16 %v875, %v868
    %v932 = vpack.c.b16 %v876, %v869
    %v933 = vpack.c.b16 %v877, %v870
    %990 = vmatprep.subr.bf16.mxu0 %v879
    %991 = vmatpush1.bf16.msra.mxu0 %v878
    %992 = vmatprep.subr.bf16.mxu0 %v886
    %993 = vmatpush1.bf16.msra.mxu0 %v885
    %994 = vmatprep.subr.bf16.mxu0 %v893
    %995 = vmatpush1.bf16.msra.mxu0 %v892
    %996 = vmatprep.subr.bf16.mxu0 %v900
    %997 = vmatpush1.bf16.msra.mxu0 %v899
    %998 = vmatprep.subr.bf16.mxu0 %v907
    %999 = vmatpush1.bf16.msra.mxu0 %v906
    %1000 = vmatprep.subr.bf16.mxu0 %v914
    %1001 = vmatpush1.bf16.msra.mxu0 %v913
    %1002 = vmatprep.subr.bf16.mxu0 %v921
    %1003 = vmatpush1.bf16.msra.mxu0 %v920
    %1004 = vmatprep.subr.bf16.mxu0 %v928
    %1005 = vmatpush1.bf16.msra.mxu0 %v927
    %1006 = vmatprep.subr.bf16.mxu0 0
    %1007 = vmatpush1.bf16.msra.mxu0 0
    %1008 = vmatprep.subr.bf16.mxu0 0
    %1009 = vmatpush1.bf16.msra.mxu0 0
    %1010 = vmatprep.subr.bf16.mxu0 0
    %1011 = vmatpush1.bf16.msra.mxu0 0
    %1012 = vmatprep.subr.bf16.mxu0 0
    %1013 = vmatpush1.bf16.msra.mxu0 0
    %1014 = vmatprep.subr.bf16.mxu0 0
    %1015 = vmatpush1.bf16.msra.mxu0 0
    %1016 = vmatprep.subr.bf16.mxu0 0
    %1017 = vmatpush1.bf16.msra.mxu0 0
    %1018 = vmatprep.subr.bf16.mxu0 0
    %1019 = vmatpush1.bf16.msra.mxu0 0
    %1020 = vmatprep.subr.bf16.mxu0 0
    %1021 = vmatpush1.bf16.msra.mxu0 0
    %1022 = vmatprep.mubr.bf16.mxu0 0
    %1023 = vmatmul.mubr.bf16.gmra.mrb[0].mxu0 %v600
    %v1024 = vpop.f32.mrb[0].mxu0
    %v1025 = vadd.f32 %v670, %v1024
    %v1026 = vpop.f32.mrb[0].mxu0
    %v1027 = vadd.f32 %v674, %v1026
    %v1028 = vpop.f32.mrb[0].mxu0
    %v1029 = vpop.f32.mrb[0].mxu0
    %1030 = vdwg.mxu0
    %1031 = vmatprep.subr.bf16.mxu0 %v881
    %1032 = vmatpush1.bf16.msra.mxu0 %v880
    %1033 = vmatprep.subr.bf16.mxu0 %v888
    %1034 = vmatpush1.bf16.msra.mxu0 %v887
    %1035 = vmatprep.subr.bf16.mxu0 %v895
    %1036 = vmatpush1.bf16.msra.mxu0 %v894
    %1037 = vmatprep.subr.bf16.mxu0 %v902
    %1038 = vmatpush1.bf16.msra.mxu0 %v901
    %1039 = vmatprep.subr.bf16.mxu0 %v909
    %1040 = vmatpush1.bf16.msra.mxu0 %v908
    %1041 = vmatprep.subr.bf16.mxu0 %v916
    %1042 = vmatpush1.bf16.msra.mxu0 %v915
    %1043 = vmatprep.subr.bf16.mxu0 %v923
    %1044 = vmatpush1.bf16.msra.mxu0 %v922
    %1045 = vmatprep.subr.bf16.mxu0 %v930
    %1046 = vmatpush1.bf16.msra.mxu0 %v929
    %1047 = vmatprep.subr.bf16.mxu0 0
    %1048 = vmatpush1.bf16.msra.mxu0 0
    %1049 = vmatprep.subr.bf16.mxu0 0
    %1050 = vmatpush1.bf16.msra.mxu0 0
    %1051 = vmatprep.subr.bf16.mxu0 0
    %1052 = vmatpush1.bf16.msra.mxu0 0
    %1053 = vmatprep.subr.bf16.mxu0 0
    %1054 = vmatpush1.bf16.msra.mxu0 0
    %1055 = vmatprep.subr.bf16.mxu0 0
    %1056 = vmatpush1.bf16.msra.mxu0 0
    %1057 = vmatprep.subr.bf16.mxu0 0
    %1058 = vmatpush1.bf16.msra.mxu0 0
    %1059 = vmatprep.subr.bf16.mxu0 0
    %1060 = vmatpush1.bf16.msra.mxu0 0
    %1061 = vmatprep.subr.bf16.mxu0 0
    %1062 = vmatpush1.bf16.msra.mxu0 0
    %1063 = vmatprep.mubr.bf16.mxu0 0
    %1064 = vmatmul.mubr.bf16.gmra.mrb[0].mxu0 %v600
    %v1065 = vpop.f32.mrb[0].mxu0
    %v1066 = vadd.f32 %v678, %v1065
    %v1067 = vpop.f32.mrb[0].mxu0
    %v1068 = vadd.f32 %v682, %v1067
    %v1069 = vpop.f32.mrb[0].mxu0
    %v1070 = vpop.f32.mrb[0].mxu0
    %1071 = vdwg.mxu0
    %1072 = vmatprep.subr.bf16.mxu0 %v883
    %1073 = vmatpush1.bf16.msra.mxu0 %v882
    %1074 = vmatprep.subr.bf16.mxu0 %v890
    %1075 = vmatpush1.bf16.msra.mxu0 %v889
    %1076 = vmatprep.subr.bf16.mxu0 %v897
    %1077 = vmatpush1.bf16.msra.mxu0 %v896
    %1078 = vmatprep.subr.bf16.mxu0 %v904
    %1079 = vmatpush1.bf16.msra.mxu0 %v903
    %1080 = vmatprep.subr.bf16.mxu0 %v911
    %1081 = vmatpush1.bf16.msra.mxu0 %v910
    %1082 = vmatprep.subr.bf16.mxu0 %v918
    %1083 = vmatpush1.bf16.msra.mxu0 %v917
    %1084 = vmatprep.subr.bf16.mxu0 %v925
    %1085 = vmatpush1.bf16.msra.mxu0 %v924
    %1086 = vmatprep.subr.bf16.mxu0 %v932
    %1087 = vmatpush1.bf16.msra.mxu0 %v931
    %1088 = vmatprep.subr.bf16.mxu0 0
    %1089 = vmatpush1.bf16.msra.mxu0 0
    %1090 = vmatprep.subr.bf16.mxu0 0
    %1091 = vmatpush1.bf16.msra.mxu0 0
    %1092 = vmatprep.subr.bf16.mxu0 0
    %1093 = vmatpush1.bf16.msra.mxu0 0
    %1094 = vmatprep.subr.bf16.mxu0 0
    %1095 = vmatpush1.bf16.msra.mxu0 0
    %1096 = vmatprep.subr.bf16.mxu0 0
    %1097 = vmatpush1.bf16.msra.mxu0 0
    %1098 = vmatprep.subr.bf16.mxu0 0
    %1099 = vmatpush1.bf16.msra.mxu0 0
    %1100 = vmatprep.subr.bf16.mxu0 0
    %1101 = vmatpush1.bf16.msra.mxu0 0
    %1102 = vmatprep.subr.bf16.mxu0 0
    %1103 = vmatpush1.bf16.msra.mxu0 0
    %1104 = vmatprep.mubr.bf16.mxu0 0
    %1105 = vmatmul.mubr.bf16.gmra.mrb[0].mxu0 %v600
    %v1106 = vpop.f32.mrb[0].mxu0
    %v1107 = vadd.f32 %v686, %v1106
    %v1108 = vpop.f32.mrb[0].mxu0
    %v1109 = vadd.f32 %v690, %v1108
    %v1110 = vpop.f32.mrb[0].mxu0
    %v1111 = vpop.f32.mrb[0].mxu0
    %1112 = vdwg.mxu0
    %1113 = vmatprep.subr.bf16.mxu0 0
    %1114 = vmatpush1.bf16.msra.mxu0 %v884
    %1115 = vmatprep.subr.bf16.mxu0 0
    %1116 = vmatpush1.bf16.msra.mxu0 %v891
    %1117 = vmatprep.subr.bf16.mxu0 0
    %1118 = vmatpush1.bf16.msra.mxu0 %v898
    %1119 = vmatprep.subr.bf16.mxu0 0
    %1120 = vmatpush1.bf16.msra.mxu0 %v905
    %1121 = vmatprep.subr.bf16.mxu0 0
    %1122 = vmatpush1.bf16.msra.mxu0 %v912
    %1123 = vmatprep.subr.bf16.mxu0 0
    %1124 = vmatpush1.bf16.msra.mxu0 %v919
    %1125 = vmatprep.subr.bf16.mxu0 0
    %1126 = vmatpush1.bf16.msra.mxu0 %v926
    %1127 = vmatprep.subr.bf16.mxu0 0
    %1128 = vmatpush1.bf16.msra.mxu0 %v933
    %1129 = vmatprep.subr.bf16.mxu0 0
    %1130 = vmatpush1.bf16.msra.mxu0 0
    %1131 = vmatprep.subr.bf16.mxu0 0
    %1132 = vmatpush1.bf16.msra.mxu0 0
    %1133 = vmatprep.subr.bf16.mxu0 0
    %1134 = vmatpush1.bf16.msra.mxu0 0
    %1135 = vmatprep.subr.bf16.mxu0 0
    %1136 = vmatpush1.bf16.msra.mxu0 0
    %1137 = vmatprep.subr.bf16.mxu0 0
    %1138 = vmatpush1.bf16.msra.mxu0 0
    %1139 = vmatprep.subr.bf16.mxu0 0
    %1140 = vmatpush1.bf16.msra.mxu0 0
    %1141 = vmatprep.subr.bf16.mxu0 0
    %1142 = vmatpush1.bf16.msra.mxu0 0
    %1143 = vmatprep.subr.bf16.mxu0 0
    %1144 = vmatpush1.bf16.msra.mxu0 0
    %1145 = vmatprep.mubr.bf16.mxu0 0
    %1146 = vmatmul.mubr.bf16.gmra.mrb[0].mxu0 %v600
    %v1147 = vpop.f32.mrb[0].mxu0
    %v1148 = vadd.f32 %v694, %v1147
    %v1149 = vpop.f32.mrb[0].mxu0
    %v1150 = vpop.f32.mrb[0].mxu0
    %v1151 = vpop.f32.mrb[0].mxu0
    %1152 = vdwg.mxu0
    %v1153 = vxor.u32 %v1025, 2147483648
    %v1154 = vxor.u32 %v1027, 2147483648
    %v1155 = vxor.u32 %v1066, 2147483648
    %v1156 = vxor.u32 %v1068, 2147483648
    %v1157 = vxor.u32 %v1107, 2147483648
    %v1158 = vxor.u32 %v1109, 2147483648
    %v1159 = vxor.u32 %v1148, 2147483648
    %v1160 = vmul.f32 %v1153, 1.442695
    %v1161 = vpow.pop %v1160
    %v1162 = vmul.f32 %v1154, 1.442695
    %v1163 = vpow.pop %v1162
    %v1164 = vmul.f32 %v1155, 1.442695
    %v1165 = vpow.pop %v1164
    %v1166 = vmul.f32 %v1156, 1.442695
    %v1167 = vpow.pop %v1166
    %v1168 = vmul.f32 %v1157, 1.442695
    %v1169 = vpow.pop %v1168
    %v1170 = vmul.f32 %v1158, 1.442695
    %v1171 = vpow.pop %v1170
    %v1172 = vmul.f32 %v1159, 1.442695
    %v1173 = vpow.pop %v1172
    %v1174 = vadd.f32 %v1161, 1.0
    %v1175 = vadd.f32 %v1163, 1.0
    %v1176 = vadd.f32 %v1165, 1.0
    %v1177 = vadd.f32 %v1167, 1.0
    %v1178 = vadd.f32 %v1169, 1.0
    %v1179 = vadd.f32 %v1171, 1.0
    %v1180 = vadd.f32 %v1173, 1.0
    %v1181 = vrcp.pop %v1174
    %v1182 = vmul.f32 1.0, %v1181
    %v1183 = vrcp.pop %v1175
    %v1184 = vmul.f32 1.0, %v1183
    %v1185 = vrcp.pop %v1176
    %v1186 = vmul.f32 1.0, %v1185
    %v1187 = vrcp.pop %v1177
    %v1188 = vmul.f32 1.0, %v1187
    %v1189 = vrcp.pop %v1178
    %v1190 = vmul.f32 1.0, %v1189
    %v1191 = vrcp.pop %v1179
    %v1192 = vmul.f32 1.0, %v1191
    %v1193 = vrcp.pop %v1180
    %v1194 = vmul.f32 1.0, %v1193
    %v1195 = vpack.c.bf16 %v1182, %v1182
    %v1196 = vpack.c.bf16 %v1184, %v1184
    %v1197 = vpack.c.bf16 %v1186, %v1186
    %v1198 = vpack.c.bf16 %v1188, %v1188
    %v1199 = vpack.c.bf16 %v1190, %v1190
    %v1200 = vpack.c.bf16 %v1192, %v1192
    %v1201 = vpack.c.bf16 %v1194, %v1194
    %v1209 = vunpack.c.l.b16 %v1195
    %v1210 = vunpack.c.l.b16 %v1196
    %v1211 = vunpack.c.l.b16 %v1197
    %v1212 = vunpack.c.l.b16 %v1198
    %v1213 = vunpack.c.l.b16 %v1199
    %v1214 = vunpack.c.l.b16 %v1200
    %v1215 = vunpack.c.l.b16 %v1201
    %v1216 = vpack.c.b16 %v1210, %v1209
    %v1217 = vpack.c.b16 %v1212, %v1211
    %v1218 = vpack.c.b16 %v1214, %v1213
    %v1219 = vpack.c.b16 %v1215, %v1215
    %1224 = vst [vmem:[#allocation2] sm:$0xff] %v1216
    %1225 = vst [vmem:[#allocation2 + $0x8] sm:$0xff] %v1217
    %1226 = vst [vmem:[#allocation2 + $0x10] sm:$0xff] %v1218
    %vm1227 = vcmask 125952
    %1228 = vst.msk [vmem:[#allocation2 + $0x18] sm:$0xf] %vm1227, %v1219
    // Predicated region
    $region22: #{autoencoder_forward.1} parent=1 // pred_check
      _
    $region23: #{autoencoder_forward.1} parent=1 // pred_check_branch
      %1230 = sbr.rel (0) target = $region25
    $region24: #{autoencoder_forward.1} parent=1 // pred_region
      %s1232 = ssub.s32 448, 448
      %1233 = vsyncadd [#allocation3], %s1232
      %s1235 = sshll.u32 [#allocation2], 4
      %s1236 = int_to_ptr.vmem [resolvable:$true] %s1235
      %1238 = dma.vmem_to_hbm [thread:$0]  %s1236, 448, %s5, [#allocation3]
    $region25: #{autoencoder_forward.1} parent=1 // pred_fallthru
      _
    // Predicated region
    $region26: #{autoencoder_forward.1} parent=1 // pred_check
      _
    $region27: #{autoencoder_forward.1} parent=1 // pred_check_branch
      %1240 = sbr.rel (0) target = $region29
    $region28: #{autoencoder_forward.1} parent=1 // pred_region
      %1241 = dma.done [#allocation3], 448
    $region29: #{autoencoder_forward.1} parent=1 // pred_fallthru
      _
    %1242 = vsyncpa [#allocation3], 1

</llo_original>
